<compile_context>
chip_gen: v5e
topology: v5e:2x2
jax: 0.10.0
libtpu: 0.0.40
codegen_flags: <defaults>
</compile_context>

<pallas_src>
import jax
import jax.numpy as jnp
from jax import lax
from jax.experimental import pallas as pl
from jax.experimental.pallas import tpu as pltpu

NUM_RELATIONS = 3
NODES_PER_GRAPH = 54  # forward() reshapes embeddings to (num_graphs, 54 * gnnOutputDim)


def _round_up(n, m):
    return ((n + m - 1) // m) * m


# ------------------------------ weight packing ------------------------------ #

def _pack_slab(entries, lanes):
    """Pack small 2-D f32 params into one (rows, lanes) slab.

    Each entry starts on an 8-row (sublane) boundary so every in-kernel ref
    slice is aligned.  Returns (slab, layout) with layout[name] = (row, r, c).
    """
    layout, rows, off = {}, [], 0
    for name, arr in entries:
        arr = jnp.asarray(arr, jnp.float32)
        r, c = arr.shape
        rpad = _round_up(r, 8)
        layout[name] = (off, r, c)
        rows.append(jnp.pad(arr, ((0, rpad - r), (0, lanes - c))))
        off += rpad
    return jnp.concatenate(rows, axis=0), layout


def prepare_params(params, num_graphs):
    """One-time repack of raw (PyTorch-layout) params into kernel layout."""
    n_real = num_graphs * NODES_PER_GRAPH
    npad = _round_up(max(n_real, 128), 128)
    lanes = npad                                   # >= 128
    gpad = _round_up(max(num_graphs, 8), 8)

    gnn_in, gnn_hid = params["g1_wroot"].shape
    gnn_out = params["g2_wroot"].shape[1]
    glob_in = params["gl1_w"].shape[0]
    n_actions = params["o3_w"].shape[1]

    def bias_bcast(b):                             # bias as (dim, npad) rows (lane-dense add)
        return jnp.broadcast_to(b[:, None], (b.shape[0], npad))

    # Per-graph sum-pooling matrix over padded nodes (zero on pad rows / pad graphs).
    node = jnp.arange(npad)
    pool = ((node[None, :] // NODES_PER_GRAPH) == jnp.arange(gpad)[:, None]) \
        & (node[None, :] < n_real)
    pool = pool.astype(jnp.float32)                # (gpad, npad)

    # Out layer 1 split: embeds part (flatten folded into pre-tiled per-node weight,
    # stored bf16) and glob part.
    d_emb = NODES_PER_GRAPH * gnn_out
    w1e = params["o1_w"][:d_emb].reshape(NODES_PER_GRAPH, gnn_out, -1)   # (54, Dout, 128)
    w1e = jnp.transpose(w1e, (1, 0, 2))                                   # (Dout, 54, 128)
    w1e = jnp.tile(w1e, (1, num_graphs, 1))                               # (Dout, G*54, 128)
    w1e = jnp.pad(w1e, ((0, 0), (0, npad - n_real), (0, 0)))              # (Dout, npad, 128)
    w1e = w1e.astype(jnp.bfloat16)
    w1g = params["o1_w"][d_emb:]                                          # (glob_in, 128)

    entries = [
        ("w1rootT", params["g1_wroot"].T),
        *[(f"w1relT{r}", params["g1_wrel"][r].T) for r in range(NUM_RELATIONS)],
        ("b1", bias_bcast(params["g1_b"])),
        ("w2rootT", params["g2_wroot"].T),
        *[(f"w2relT{r}", params["g2_wrel"][r].T) for r in range(NUM_RELATIONS)],
        ("b2", bias_bcast(params["g2_b"])),
        ("pool", pool),
        ("w1g", w1g), ("ob1", params["o1_b"][None, :]),
        ("gw1", params["gl1_w"]), ("gb1", params["gl1_b"][None, :]),
        ("gw2", params["gl2_w"]), ("gb2", params["gl2_b"][None, :]),
        ("gw3", params["gl3_w"]), ("gb3", params["gl3_b"][None, :]),
        ("o2w", params["o2_w"]), ("o2b", params["o2_b"][None, :]),
        ("o3w", params["o3_w"]), ("o3b", params["o3_b"][None, :]),
    ]
    slab, layout = _pack_slab(entries, lanes)

    dims = dict(R=NUM_RELATIONS, npad=npad, n_real=n_real, G=num_graphs, gpad=gpad,
                din=gnn_in, dhid=gnn_hid, dout=gnn_out,
                glob_in=glob_in, n_actions=n_actions)
    return {"slab": slab, "w1e": w1e}, layout, dims


# ----------------------------- fused Pallas kernel -------------------------- #

def _make_kernel(layout, dims):
    R, npad, n_real = dims["R"], dims["npad"], dims["n_real"]
    G, gpad, dout = dims["G"], dims["gpad"], dims["dout"]
    f32, bf16 = jnp.float32, jnp.bfloat16

    def kernel(x_ref, a_ref, w1e_ref, glob_ref, slab_ref, out_ref):
        def rd(name):                                    # static ref slice: free view + small load
            off, r, c = layout[name]
            return slab_ref[off:off + r, 0:c]

        node_mask = lax.broadcasted_iota(jnp.int32, (1, npad), 1) < n_real

        def rgcn_layer(hT, wrootT, wrelTs, b_bcast):
            # Transposed RGCN layer; activations are (features, npad) = lane-dense.
            # One stacked bf16 MXU matmul for all relations, explicit f32 root transform.
            m = jnp.dot(hT.astype(bf16), a_ref[...], preferred_element_type=f32)  # (d, R*npad)
            acc = jnp.dot(wrootT, hT, preferred_element_type=f32)                 # root
            for r in range(R):                                                    # static unroll
                acc = acc + jnp.dot(wrelTs[r], m[:, r * npad:(r + 1) * npad],
                                    preferred_element_type=f32)
            acc = jnp.maximum(acc + b_bcast, 0.0)
            return jnp.where(node_mask, acc, 0.0)        # keep pad nodes exactly zero

        h = rgcn_layer(x_ref[...], rd("w1rootT"),
                       [rd(f"w1relT{r}") for r in range(R)], rd("b1"))
        h = rgcn_layer(h, rd("w2rootT"),
                       [rd(f"w2relT{r}") for r in range(R)], rd("b2"))   # (Dout, npad)

        # Out layer 1, embeds contribution: the (54*Dout) flatten is folded into the
        # pre-tiled bf16 weight w1e (Dout, npad, 128).  Because the GNN is transposed,
        # h rows are already the per-feature node vectors:
        #   emb = sum_d (pool * h[d]) @ w1e[d]   -- sublane broadcast + MXU matmul.
        pool = rd("pool")                                 # (gpad, npad)
        emb = jnp.zeros((gpad, w1e_ref.shape[2]), f32)
        for d in range(dout):                             # static unroll (Dout = 4)
            sp = (pool * h[d:d + 1, :]).astype(bf16)      # (gpad, npad)
            emb = emb + jnp.dot(sp, w1e_ref[d], preferred_element_type=f32)

        # Global MLP (graph rows padded to 8 sublanes in the wrapper).
        g = glob_ref[...]
        g = jnp.maximum(jnp.dot(g, rd("gw1"), preferred_element_type=f32) + rd("gb1"), 0.0)
        g = jnp.maximum(jnp.dot(g, rd("gw2"), preferred_element_type=f32) + rd("gb2"), 0.0)
        g = jnp.maximum(jnp.dot(g, rd("gw3"), preferred_element_type=f32) + rd("gb3"), 0.0)

        # Out MLP (concat folded: embeds part = emb, glob part = g @ w1g).
        o = jnp.maximum(emb + jnp.dot(g, rd("w1g"), preferred_element_type=f32) + rd("ob1"), 0.0)
        o = jnp.maximum(jnp.dot(o, rd("o2w"), preferred_element_type=f32) + rd("o2b"), 0.0)
        o = jnp.dot(o, rd("o3w"), preferred_element_type=f32) + rd("o3b")
        out_ref[...] = o[:G, :]

    return kernel


# ------------------------------- JAX wrappers -------------------------------- #

def build_norm_adj(edge_index, edge_type, num_nodes):
    """Dense per-relation adjacency, mean-normalized (PyG RGCNConv aggr='mean').
    Duplicate edges counted with multiplicity in numerator and row-sum (scatter-mean)."""
    src, dst = edge_index[0], edge_index[1]
    a = jnp.zeros((NUM_RELATIONS, num_nodes, num_nodes), jnp.float32)
    a = a.at[edge_type, dst, src].add(1.0)
    deg = a.sum(axis=2, keepdims=True)
    return a / jnp.maximum(deg, 1.0)


def make_forward(layout, dims):
    kernel = _make_kernel(layout, dims)
    R, npad, n_real = dims["R"], dims["npad"], dims["n_real"]
    G, gpad, nA = dims["G"], dims["gpad"], dims["n_actions"]
    vmem = pl.BlockSpec(memory_space=pltpu.MemorySpace.VMEM)

    @jax.jit
    def forward(kp, x, adj, glob):
        """x: (n_real, gnn_in); adj: (R, n_real, n_real) mean-normalized; glob: (G, glob_in)."""
        # Transposed node features, padded to a lane-aligned node count.
        xT = jnp.pad(x.astype(jnp.float32), ((0, npad - n_real), (0, 0))).T      # (Din, npad)
        # Transposed adjacencies, lane-concatenated: a_cat[:, r*npad + j] = A_r[j, :]^T (bf16).
        aT = jnp.transpose(adj, (0, 2, 1))
        aT = jnp.pad(aT, ((0, 0), (0, npad - n_real), (0, npad - n_real)))
        a_cat = jnp.transpose(aT, (1, 0, 2)).reshape(npad, R * npad).astype(jnp.bfloat16)
        glob_p = jnp.pad(glob.astype(jnp.float32), ((0, gpad - G), (0, 0)))      # (8, glob_in)

        return pl.pallas_call(
            kernel,
            out_shape=jax.ShapeDtypeStruct((G, nA), jnp.float32),
            in_specs=[vmem] * 5,
            out_specs=vmem,
        )(xT, a_cat, kp["w1e"], glob_p, kp["slab"])

    return forward


# ------------------------- params + pure-JAX reference ----------------------- #

def init_params(key, gnn_in, gnn_hid, gnn_out, glob_in, n_actions):
    ks = jax.random.split(key, 16)
    s = 0.1

    def w(k, shape):
        return jax.random.normal(k, shape, jnp.float32) * s

    return {
        "g1_wrel": w(ks[0], (NUM_RELATIONS, gnn_in, gnn_hid)),
        "g1_wroot": w(ks[1], (gnn_in, gnn_hid)),
        "g1_b": w(ks[2], (gnn_hid,)),
        "g2_wrel": w(ks[3], (NUM_RELATIONS, gnn_hid, gnn_out)),
        "g2_wroot": w(ks[4], (gnn_hid, gnn_out)),
        "g2_b": w(ks[5], (gnn_out,)),
        "gl1_w": w(ks[6], (glob_in, 8)), "gl1_b": w(ks[7], (8,)),
        "gl2_w": w(ks[8], (8, 8)),       "gl2_b": w(ks[9], (8,)),
        "gl3_w": w(ks[10], (8, glob_in)), "gl3_b": w(ks[11], (glob_in,)),
        "o1_w": w(ks[12], (NODES_PER_GRAPH * gnn_out + glob_in, 128)), "o1_b": w(ks[13], (128,)),
        "o2_w": w(ks[14], (128, 128)), "o2_b": w(ks[15], (128,)),
        "o3_w": w(jax.random.fold_in(key, 99), (128, n_actions)),
        "o3_b": w(jax.random.fold_in(key, 100), (n_actions,)),
    }


def reference_forward(params, x, adj, glob, num_graphs):
    def rgcn(h, wrel, wroot, bias):
        out = h @ wroot + bias
        for r in range(NUM_RELATIONS):
            out = out + adj[r] @ (h @ wrel[r])
        return jax.nn.relu(out)

    h = rgcn(x, params["g1_wrel"], params["g1_wroot"], params["g1_b"])
    h = rgcn(h, params["g2_wrel"], params["g2_wroot"], params["g2_b"])
    gnn_out = params["g2_wroot"].shape[1]
    embeds = h.reshape(num_graphs, NODES_PER_GRAPH * gnn_out)
    g = glob
    g = jax.nn.relu(g @ params["gl1_w"] + params["gl1_b"])
    g = jax.nn.relu(g @ params["gl2_w"] + params["gl2_b"])
    g = jax.nn.relu(g @ params["gl3_w"] + params["gl3_b"])
    cat = jnp.concatenate([embeds, g], axis=-1)
    o = jax.nn.relu(cat @ params["o1_w"] + params["o1_b"])
    o = jax.nn.relu(o @ params["o2_w"] + params["o2_b"])
    return o @ params["o3_w"] + params["o3_b"]


# ------------------------------------ main ----------------------------------- #

if __name__ == "__main__":
    gnn_input_dim, gnn_hidden_dim, gnn_output_dim = 8, 16, 4
    glob_input_dim, n_actions = 6, 5
    num_graphs = 2
    num_nodes = num_graphs * NODES_PER_GRAPH  # 108
    edges_per_graph = 150

    key = jax.random.PRNGKey(0)
    k_param, k_x, k_glob, k_src, k_dst, k_rel = jax.random.split(key, 6)

    params = init_params(k_param, gnn_input_dim, gnn_hidden_dim,
                         gnn_output_dim, glob_input_dim, n_actions)

    x = jax.random.normal(k_x, (num_nodes, gnn_input_dim), jnp.float32)
    glob = jax.random.normal(k_glob, (num_graphs, glob_input_dim), jnp.float32)

    # Random edges kept within each graph (batched disjoint graphs), 3 relation types.
    src_local = jax.random.randint(k_src, (num_graphs, edges_per_graph), 0, NODES_PER_GRAPH)
    dst_local = jax.random.randint(k_dst, (num_graphs, edges_per_graph), 0, NODES_PER_GRAPH)
    offsets = (jnp.arange(num_graphs) * NODES_PER_GRAPH)[:, None]
    edge_index = jnp.stack([(src_local + offsets).reshape(-1),
                            (dst_local + offsets).reshape(-1)], axis=0).astype(jnp.int32)
    edge_attr = jax.random.randint(k_rel, (num_graphs * edges_per_graph,), 0, NUM_RELATIONS)

    adj = build_norm_adj(edge_index, edge_attr, num_nodes)

    kernel_params, layout, dims = prepare_params(params, num_graphs)   # one-time repack
    forward = make_forward(layout, dims)

    out = forward(kernel_params, x, adj, glob)
    out = jax.block_until_ready(out)
    assert out.shape == (num_graphs, n_actions), out.shape

    ref = reference_forward(params, x, adj, glob, num_graphs)
    max_err = float(jnp.max(jnp.abs(out - ref)))
    # Error floor is set by the bf16 MXU inputs (adjacency / w1e / activations into
    # the stacked matmul), ~1e-2 worst case at these magnitudes; f32 path would be <=1e-4.
    assert max_err < 2e-2, f"mismatch vs reference: {max_err}"
    print("KERNEL_OK")
</pallas_src>

<mosaic_0001>
module attributes {stable_mosaic.version = 11 : i64} {
  func.func @kernel(%arg0: memref<8x128xf32, #tpu.memory_space<vmem>>, %arg1: memref<128x384xbf16, #tpu.memory_space<vmem>>, %arg2: memref<4x128x128xbf16, #tpu.memory_space<vmem>>, %arg3: memref<8x6xf32, #tpu.memory_space<vmem>>, %arg4: memref<464x128xf32, #tpu.memory_space<vmem>>, %arg5: memref<2x5xf32, #tpu.memory_space<vmem>>) attributes {dimension_semantics = [], scalar_prefetch = 0 : i64, scratch_operands = 0 : i64, tpu.core_type = #tpu.core_type<tc>} {
    %0 = tpu.iota {dimensions = array<i32: 1>} : vector<1x128xi32>
    %c108_i32 = arith.constant 108 : i32
    %1 = vector.broadcast %c108_i32 : i32 to vector<1x128xi32>
    %2 = arith.cmpi slt, %0, %1 : vector<1x128xi32>
    %c0 = arith.constant 0 : index
    %c0_0 = arith.constant 0 : index
    %3 = vector.load %arg0[%c0, %c0_0] : memref<8x128xf32, #tpu.memory_space<vmem>>, vector<8x128xf32>
    %c0_1 = arith.constant 0 : index
    %c0_2 = arith.constant 0 : index
    %4 = vector.load %arg4[%c0_1, %c0_2] : memref<464x128xf32, #tpu.memory_space<vmem>>, vector<16x8xf32>
    %c16 = arith.constant 16 : index
    %c0_3 = arith.constant 0 : index
    %5 = vector.load %arg4[%c16, %c0_3] : memref<464x128xf32, #tpu.memory_space<vmem>>, vector<16x8xf32>
    %c32 = arith.constant 32 : index
    %c0_4 = arith.constant 0 : index
    %6 = vector.load %arg4[%c32, %c0_4] : memref<464x128xf32, #tpu.memory_space<vmem>>, vector<16x8xf32>
    %c48 = arith.constant 48 : index
    %c0_5 = arith.constant 0 : index
    %7 = vector.load %arg4[%c48, %c0_5] : memref<464x128xf32, #tpu.memory_space<vmem>>, vector<16x8xf32>
    %c64 = arith.constant 64 : index
    %c0_6 = arith.constant 0 : index
    %8 = vector.load %arg4[%c64, %c0_6] : memref<464x128xf32, #tpu.memory_space<vmem>>, vector<16x128xf32>
    %9 = arith.truncf %3 : vector<8x128xf32> to vector<8x128xbf16>
    %c0_7 = arith.constant 0 : index
    %c0_8 = arith.constant 0 : index
    %10 = vector.load %arg1[%c0_7, %c0_8] : memref<128x384xbf16, #tpu.memory_space<vmem>>, vector<128x384xbf16>
    %cst = arith.constant dense<0.000000e+00> : vector<8x384xf32>
    %11 = tpu.matmul %9, %10, %cst {dimension_numbers = #tpu.dot_dimension_numbers<[1], [0], [0], [1], [0, 0, 1, 1], [], []>} : vector<8x128xbf16>, vector<128x384xbf16>, vector<8x384xf32> -> vector<8x384xf32>
    %cst_9 = arith.constant dense<0.000000e+00> : vector<16x128xf32>
    %12 = tpu.matmul %4, %3, %cst_9 {dimension_numbers = #tpu.dot_dimension_numbers<[1], [0], [0], [1], [0, 0, 1, 1], [], []>} : vector<16x8xf32>, vector<8x128xf32>, vector<16x128xf32> -> vector<16x128xf32>
    %13 = vector.extract_strided_slice %11 {offsets = [0, 0], sizes = [8, 128], strides = [1, 1]} : vector<8x384xf32> to vector<8x128xf32>
    %cst_10 = arith.constant dense<0.000000e+00> : vector<16x128xf32>
    %14 = tpu.matmul %5, %13, %cst_10 {dimension_numbers = #tpu.dot_dimension_numbers<[1], [0], [0], [1], [0, 0, 1, 1], [], []>} : vector<16x8xf32>, vector<8x128xf32>, vector<16x128xf32> -> vector<16x128xf32>
    %15 = arith.addf %12, %14 : vector<16x128xf32>
    %16 = vector.extract_strided_slice %11 {offsets = [0, 128], sizes = [8, 128], strides = [1, 1]} : vector<8x384xf32> to vector<8x128xf32>
    %cst_11 = arith.constant dense<0.000000e+00> : vector<16x128xf32>
    %17 = tpu.matmul %6, %16, %cst_11 {dimension_numbers = #tpu.dot_dimension_numbers<[1], [0], [0], [1], [0, 0, 1, 1], [], []>} : vector<16x8xf32>, vector<8x128xf32>, vector<16x128xf32> -> vector<16x128xf32>
    %18 = arith.addf %15, %17 : vector<16x128xf32>
    %19 = vector.extract_strided_slice %11 {offsets = [0, 256], sizes = [8, 128], strides = [1, 1]} : vector<8x384xf32> to vector<8x128xf32>
    %cst_12 = arith.constant dense<0.000000e+00> : vector<16x128xf32>
    %20 = tpu.matmul %7, %19, %cst_12 {dimension_numbers = #tpu.dot_dimension_numbers<[1], [0], [0], [1], [0, 0, 1, 1], [], []>} : vector<16x8xf32>, vector<8x128xf32>, vector<16x128xf32> -> vector<16x128xf32>
    %21 = arith.addf %18, %20 : vector<16x128xf32>
    %22 = arith.addf %21, %8 : vector<16x128xf32>
    %cst_13 = arith.constant 0.000000e+00 : f32
    %23 = vector.broadcast %cst_13 : f32 to vector<16x128xf32>
    %24 = arith.maximumf %22, %23 : vector<16x128xf32>
    %cst_14 = arith.constant 0.000000e+00 : f32
    %25 = vector.shape_cast %2 : vector<1x128xi1> to vector<1x128xi1>
    %26 = vector.broadcast %25 : vector<1x128xi1> to vector<16x128xi1>
    %27 = vector.broadcast %cst_14 : f32 to vector<16x128xf32>
    %28 = arith.select %26, %24, %27 : vector<16x128xi1>, vector<16x128xf32>
    %c80 = arith.constant 80 : index
    %c0_15 = arith.constant 0 : index
    %29 = vector.load %arg4[%c80, %c0_15] : memref<464x128xf32, #tpu.memory_space<vmem>>, vector<4x16xf32>
    %c88 = arith.constant 88 : index
    %c0_16 = arith.constant 0 : index
    %30 = vector.load %arg4[%c88, %c0_16] : memref<464x128xf32, #tpu.memory_space<vmem>>, vector<4x16xf32>
    %c96 = arith.constant 96 : index
    %c0_17 = arith.constant 0 : index
    %31 = vector.load %arg4[%c96, %c0_17] : memref<464x128xf32, #tpu.memory_space<vmem>>, vector<4x16xf32>
    %c104 = arith.constant 104 : index
    %c0_18 = arith.constant 0 : index
    %32 = vector.load %arg4[%c104, %c0_18] : memref<464x128xf32, #tpu.memory_space<vmem>>, vector<4x16xf32>
    %c112 = arith.constant 112 : index
    %c0_19 = arith.constant 0 : index
    %33 = vector.load %arg4[%c112, %c0_19] : memref<464x128xf32, #tpu.memory_space<vmem>>, vector<4x128xf32>
    %34 = arith.truncf %28 : vector<16x128xf32> to vector<16x128xbf16>
    %c0_20 = arith.constant 0 : index
    %c0_21 = arith.constant 0 : index
    %35 = vector.load %arg1[%c0_20, %c0_21] : memref<128x384xbf16, #tpu.memory_space<vmem>>, vector<128x384xbf16>
    %cst_22 = arith.constant dense<0.000000e+00> : vector<16x384xf32>
    %36 = tpu.matmul %34, %35, %cst_22 {dimension_numbers = #tpu.dot_dimension_numbers<[1], [0], [0], [1], [0, 0, 1, 1], [], []>} : vector<16x128xbf16>, vector<128x384xbf16>, vector<16x384xf32> -> vector<16x384xf32>
    %cst_23 = arith.constant dense<0.000000e+00> : vector<4x128xf32>
    %37 = tpu.matmul %29, %28, %cst_23 {dimension_numbers = #tpu.dot_dimension_numbers<[1], [0], [0], [1], [0, 0, 1, 1], [], []>} : vector<4x16xf32>, vector<16x128xf32>, vector<4x128xf32> -> vector<4x128xf32>
    %38 = vector.extract_strided_slice %36 {offsets = [0, 0], sizes = [16, 128], strides = [1, 1]} : vector<16x384xf32> to vector<16x128xf32>
    %cst_24 = arith.constant dense<0.000000e+00> : vector<4x128xf32>
    %39 = tpu.matmul %30, %38, %cst_24 {dimension_numbers = #tpu.dot_dimension_numbers<[1], [0], [0], [1], [0, 0, 1, 1], [], []>} : vector<4x16xf32>, vector<16x128xf32>, vector<4x128xf32> -> vector<4x128xf32>
    %40 = arith.addf %37, %39 : vector<4x128xf32>
    %41 = vector.extract_strided_slice %36 {offsets = [0, 128], sizes = [16, 128], strides = [1, 1]} : vector<16x384xf32> to vector<16x128xf32>
    %cst_25 = arith.constant dense<0.000000e+00> : vector<4x128xf32>
    %42 = tpu.matmul %31, %41, %cst_25 {dimension_numbers = #tpu.dot_dimension_numbers<[1], [0], [0], [1], [0, 0, 1, 1], [], []>} : vector<4x16xf32>, vector<16x128xf32>, vector<4x128xf32> -> vector<4x128xf32>
    %43 = arith.addf %40, %42 : vector<4x128xf32>
    %44 = vector.extract_strided_slice %36 {offsets = [0, 256], sizes = [16, 128], strides = [1, 1]} : vector<16x384xf32> to vector<16x128xf32>
    %cst_26 = arith.constant dense<0.000000e+00> : vector<4x128xf32>
    %45 = tpu.matmul %32, %44, %cst_26 {dimension_numbers = #tpu.dot_dimension_numbers<[1], [0], [0], [1], [0, 0, 1, 1], [], []>} : vector<4x16xf32>, vector<16x128xf32>, vector<4x128xf32> -> vector<4x128xf32>
    %46 = arith.addf %43, %45 : vector<4x128xf32>
    %47 = arith.addf %46, %33 : vector<4x128xf32>
    %cst_27 = arith.constant 0.000000e+00 : f32
    %48 = vector.broadcast %cst_27 : f32 to vector<4x128xf32>
    %49 = arith.maximumf %47, %48 : vector<4x128xf32>
    %cst_28 = arith.constant 0.000000e+00 : f32
    %50 = vector.shape_cast %2 : vector<1x128xi1> to vector<1x128xi1>
    %51 = vector.broadcast %50 : vector<1x128xi1> to vector<4x128xi1>
    %52 = vector.broadcast %cst_28 : f32 to vector<4x128xf32>
    %53 = arith.select %51, %49, %52 : vector<4x128xi1>, vector<4x128xf32>
    %c120 = arith.constant 120 : index
    %c0_29 = arith.constant 0 : index
    %54 = vector.load %arg4[%c120, %c0_29] : memref<464x128xf32, #tpu.memory_space<vmem>>, vector<8x128xf32>
    %cst_30 = arith.constant 0.000000e+00 : f32
    %55 = vector.broadcast %cst_30 : f32 to vector<8x128xf32>
    %56 = vector.extract_strided_slice %53 {offsets = [0, 0], sizes = [1, 128], strides = [1, 1]} : vector<4x128xf32> to vector<1x128xf32>
    %57 = vector.broadcast %56 : vector<1x128xf32> to vector<8x128xf32>
    %58 = arith.mulf %54, %57 : vector<8x128xf32>
    %59 = arith.truncf %58 : vector<8x128xf32> to vector<8x128xbf16>
    %c0_31 = arith.constant 0 : index
    %c0_32 = arith.constant 0 : index
    %c0_33 = arith.constant 0 : index
    %60 = vector.load %arg2[%c0_31, %c0_32, %c0_33] : memref<4x128x128xbf16, #tpu.memory_space<vmem>>, vector<1x128x128xbf16>
    %61 = vector.shape_cast %60 : vector<1x128x128xbf16> to vector<128x128xbf16>
    %cst_34 = arith.constant dense<0.000000e+00> : vector<8x128xf32>
    %62 = tpu.matmul %59, %61, %cst_34 {dimension_numbers = #tpu.dot_dimension_numbers<[1], [0], [0], [1], [0, 0, 1, 1], [], []>} : vector<8x128xbf16>, vector<128x128xbf16>, vector<8x128xf32> -> vector<8x128xf32>
    %63 = arith.addf %55, %62 : vector<8x128xf32>
    %64 = vector.extract_strided_slice %53 {offsets = [1, 0], sizes = [1, 128], strides = [1, 1]} : vector<4x128xf32> to vector<1x128xf32>
    %65 = vector.broadcast %64 : vector<1x128xf32> to vector<8x128xf32>
    %66 = arith.mulf %54, %65 : vector<8x128xf32>
    %67 = arith.truncf %66 : vector<8x128xf32> to vector<8x128xbf16>
    %c1 = arith.constant 1 : index
    %c0_35 = arith.constant 0 : index
    %c0_36 = arith.constant 0 : index
    %68 = vector.load %arg2[%c1, %c0_35, %c0_36] : memref<4x128x128xbf16, #tpu.memory_space<vmem>>, vector<1x128x128xbf16>
    %69 = vector.shape_cast %68 : vector<1x128x128xbf16> to vector<128x128xbf16>
    %cst_37 = arith.constant dense<0.000000e+00> : vector<8x128xf32>
    %70 = tpu.matmul %67, %69, %cst_37 {dimension_numbers = #tpu.dot_dimension_numbers<[1], [0], [0], [1], [0, 0, 1, 1], [], []>} : vector<8x128xbf16>, vector<128x128xbf16>, vector<8x128xf32> -> vector<8x128xf32>
    %71 = arith.addf %63, %70 : vector<8x128xf32>
    %72 = vector.extract_strided_slice %53 {offsets = [2, 0], sizes = [1, 128], strides = [1, 1]} : vector<4x128xf32> to vector<1x128xf32>
    %73 = vector.broadcast %72 : vector<1x128xf32> to vector<8x128xf32>
    %74 = arith.mulf %54, %73 : vector<8x128xf32>
    %75 = arith.truncf %74 : vector<8x128xf32> to vector<8x128xbf16>
    %c2 = arith.constant 2 : index
    %c0_38 = arith.constant 0 : index
    %c0_39 = arith.constant 0 : index
    %76 = vector.load %arg2[%c2, %c0_38, %c0_39] : memref<4x128x128xbf16, #tpu.memory_space<vmem>>, vector<1x128x128xbf16>
    %77 = vector.shape_cast %76 : vector<1x128x128xbf16> to vector<128x128xbf16>
    %cst_40 = arith.constant dense<0.000000e+00> : vector<8x128xf32>
    %78 = tpu.matmul %75, %77, %cst_40 {dimension_numbers = #tpu.dot_dimension_numbers<[1], [0], [0], [1], [0, 0, 1, 1], [], []>} : vector<8x128xbf16>, vector<128x128xbf16>, vector<8x128xf32> -> vector<8x128xf32>
    %79 = arith.addf %71, %78 : vector<8x128xf32>
    %80 = vector.extract_strided_slice %53 {offsets = [3, 0], sizes = [1, 128], strides = [1, 1]} : vector<4x128xf32> to vector<1x128xf32>
    %81 = vector.broadcast %80 : vector<1x128xf32> to vector<8x128xf32>
    %82 = arith.mulf %54, %81 : vector<8x128xf32>
    %83 = arith.truncf %82 : vector<8x128xf32> to vector<8x128xbf16>
    %c3 = arith.constant 3 : index
    %c0_41 = arith.constant 0 : index
    %c0_42 = arith.constant 0 : index
    %84 = vector.load %arg2[%c3, %c0_41, %c0_42] : memref<4x128x128xbf16, #tpu.memory_space<vmem>>, vector<1x128x128xbf16>
    %85 = vector.shape_cast %84 : vector<1x128x128xbf16> to vector<128x128xbf16>
    %cst_43 = arith.constant dense<0.000000e+00> : vector<8x128xf32>
    %86 = tpu.matmul %83, %85, %cst_43 {dimension_numbers = #tpu.dot_dimension_numbers<[1], [0], [0], [1], [0, 0, 1, 1], [], []>} : vector<8x128xbf16>, vector<128x128xbf16>, vector<8x128xf32> -> vector<8x128xf32>
    %87 = arith.addf %79, %86 : vector<8x128xf32>
    %c0_44 = arith.constant 0 : index
    %c0_45 = arith.constant 0 : index
    %88 = vector.load %arg3[%c0_44, %c0_45] : memref<8x6xf32, #tpu.memory_space<vmem>>, vector<8x6xf32>
    %c144 = arith.constant 144 : index
    %c0_46 = arith.constant 0 : index
    %89 = vector.load %arg4[%c144, %c0_46] : memref<464x128xf32, #tpu.memory_space<vmem>>, vector<6x8xf32>
    %cst_47 = arith.constant dense<0.000000e+00> : vector<8x8xf32>
    %90 = tpu.matmul %88, %89, %cst_47 {dimension_numbers = #tpu.dot_dimension_numbers<[1], [0], [0], [1], [0, 0, 1, 1], [], []>} : vector<8x6xf32>, vector<6x8xf32>, vector<8x8xf32> -> vector<8x8xf32>
    %c152 = arith.constant 152 : index
    %c0_48 = arith.constant 0 : index
    %91 = vector.load %arg4[%c152, %c0_48] : memref<464x128xf32, #tpu.memory_space<vmem>>, vector<1x8xf32>
    %92 = vector.broadcast %91 : vector<1x8xf32> to vector<8x8xf32>
    %93 = arith.addf %90, %92 : vector<8x8xf32>
    %cst_49 = arith.constant 0.000000e+00 : f32
    %94 = vector.broadcast %cst_49 : f32 to vector<8x8xf32>
    %95 = arith.maximumf %93, %94 : vector<8x8xf32>
    %c160 = arith.constant 160 : index
    %c0_50 = arith.constant 0 : index
    %96 = vector.load %arg4[%c160, %c0_50] : memref<464x128xf32, #tpu.memory_space<vmem>>, vector<8x8xf32>
    %cst_51 = arith.constant dense<0.000000e+00> : vector<8x8xf32>
    %97 = tpu.matmul %95, %96, %cst_51 {dimension_numbers = #tpu.dot_dimension_numbers<[1], [0], [0], [1], [0, 0, 1, 1], [], []>} : vector<8x8xf32>, vector<8x8xf32>, vector<8x8xf32> -> vector<8x8xf32>
    %c168 = arith.constant 168 : index
    %c0_52 = arith.constant 0 : index
    %98 = vector.load %arg4[%c168, %c0_52] : memref<464x128xf32, #tpu.memory_space<vmem>>, vector<1x8xf32>
    %99 = vector.broadcast %98 : vector<1x8xf32> to vector<8x8xf32>
    %100 = arith.addf %97, %99 : vector<8x8xf32>
    %cst_53 = arith.constant 0.000000e+00 : f32
    %101 = vector.broadcast %cst_53 : f32 to vector<8x8xf32>
    %102 = arith.maximumf %100, %101 : vector<8x8xf32>
    %c176 = arith.constant 176 : index
    %c0_54 = arith.constant 0 : index
    %103 = vector.load %arg4[%c176, %c0_54] : memref<464x128xf32, #tpu.memory_space<vmem>>, vector<8x6xf32>
    %cst_55 = arith.constant dense<0.000000e+00> : vector<8x6xf32>
    %104 = tpu.matmul %102, %103, %cst_55 {dimension_numbers = #tpu.dot_dimension_numbers<[1], [0], [0], [1], [0, 0, 1, 1], [], []>} : vector<8x8xf32>, vector<8x6xf32>, vector<8x6xf32> -> vector<8x6xf32>
    %c184 = arith.constant 184 : index
    %c0_56 = arith.constant 0 : index
    %105 = vector.load %arg4[%c184, %c0_56] : memref<464x128xf32, #tpu.memory_space<vmem>>, vector<1x6xf32>
    %106 = vector.broadcast %105 : vector<1x6xf32> to vector<8x6xf32>
    %107 = arith.addf %104, %106 : vector<8x6xf32>
    %cst_57 = arith.constant 0.000000e+00 : f32
    %108 = vector.broadcast %cst_57 : f32 to vector<8x6xf32>
    %109 = arith.maximumf %107, %108 : vector<8x6xf32>
    %c128 = arith.constant 128 : index
    %c0_58 = arith.constant 0 : index
    %110 = vector.load %arg4[%c128, %c0_58] : memref<464x128xf32, #tpu.memory_space<vmem>>, vector<6x128xf32>
    %cst_59 = arith.constant dense<0.000000e+00> : vector<8x128xf32>
    %111 = tpu.matmul %109, %110, %cst_59 {dimension_numbers = #tpu.dot_dimension_numbers<[1], [0], [0], [1], [0, 0, 1, 1], [], []>} : vector<8x6xf32>, vector<6x128xf32>, vector<8x128xf32> -> vector<8x128xf32>
    %112 = arith.addf %87, %111 : vector<8x128xf32>
    %c136 = arith.constant 136 : index
    %c0_60 = arith.constant 0 : index
    %113 = vector.load %arg4[%c136, %c0_60] : memref<464x128xf32, #tpu.memory_space<vmem>>, vector<1x128xf32>
    %114 = vector.broadcast %113 : vector<1x128xf32> to vector<8x128xf32>
    %115 = arith.addf %112, %114 : vector<8x128xf32>
    %cst_61 = arith.constant 0.000000e+00 : f32
    %116 = vector.broadcast %cst_61 : f32 to vector<8x128xf32>
    %117 = arith.maximumf %115, %116 : vector<8x128xf32>
    %c192 = arith.constant 192 : index
    %c0_62 = arith.constant 0 : index
    %118 = vector.load %arg4[%c192, %c0_62] : memref<464x128xf32, #tpu.memory_space<vmem>>, vector<128x128xf32>
    %cst_63 = arith.constant dense<0.000000e+00> : vector<8x128xf32>
    %119 = tpu.matmul %117, %118, %cst_63 {dimension_numbers = #tpu.dot_dimension_numbers<[1], [0], [0], [1], [0, 0, 1, 1], [], []>} : vector<8x128xf32>, vector<128x128xf32>, vector<8x128xf32> -> vector<8x128xf32>
    %c320 = arith.constant 320 : index
    %c0_64 = arith.constant 0 : index
    %120 = vector.load %arg4[%c320, %c0_64] : memref<464x128xf32, #tpu.memory_space<vmem>>, vector<1x128xf32>
    %121 = vector.broadcast %120 : vector<1x128xf32> to vector<8x128xf32>
    %122 = arith.addf %119, %121 : vector<8x128xf32>
    %cst_65 = arith.constant 0.000000e+00 : f32
    %123 = vector.broadcast %cst_65 : f32 to vector<8x128xf32>
    %124 = arith.maximumf %122, %123 : vector<8x128xf32>
    %c328 = arith.constant 328 : index
    %c0_66 = arith.constant 0 : index
    %125 = vector.load %arg4[%c328, %c0_66] : memref<464x128xf32, #tpu.memory_space<vmem>>, vector<128x5xf32>
    %cst_67 = arith.constant dense<0.000000e+00> : vector<8x5xf32>
    %126 = tpu.matmul %124, %125, %cst_67 {dimension_numbers = #tpu.dot_dimension_numbers<[1], [0], [0], [1], [0, 0, 1, 1], [], []>} : vector<8x128xf32>, vector<128x5xf32>, vector<8x5xf32> -> vector<8x5xf32>
    %c456 = arith.constant 456 : index
    %c0_68 = arith.constant 0 : index
    %127 = vector.load %arg4[%c456, %c0_68] : memref<464x128xf32, #tpu.memory_space<vmem>>, vector<1x5xf32>
    %128 = vector.broadcast %127 : vector<1x5xf32> to vector<8x5xf32>
    %129 = arith.addf %126, %128 : vector<8x5xf32>
    %130 = vector.extract_strided_slice %129 {offsets = [0, 0], sizes = [2, 5], strides = [1, 1]} : vector<8x5xf32> to vector<2x5xf32>
    %c0_69 = arith.constant 0 : index
    %c0_70 = arith.constant 0 : index
    %131 = vector.load %arg5[%c0_69, %c0_70] : memref<2x5xf32, #tpu.memory_space<vmem>>, vector<2x5xf32>
    tpu.vector_store %arg5[%c0_69, %c0_70], %130 {strides = array<i32>} : memref<2x5xf32, #tpu.memory_space<vmem>>, vector<2x5xf32>,
    return
  }
}

</mosaic_0001>

<llo_original>
// kernel: forward.1
$region0: #{forward.1}
  #allocation0 [shape = 'u32[]', space=smem, size = 0x4, offset = 0x4, fixed_abs, tag = 'smem constant byte address 0x4 - core index']
  #allocation1 [shape = 'u32[72,128]{1,0:T(1,128)}', space=vmem, size = 0x9000, scoped, tag = 'internal scratch']
  %s0 = inlined_call_operand.vmem [shape: f32[8,128], index: 0, kind: input, shape index: {}]
  %s1 = inlined_call_operand.vmem [shape: bf16[128,384], index: 1, kind: input, shape index: {}]
  %s2 = inlined_call_operand.vmem [shape: bf16[4,128,128], index: 2, kind: input, shape index: {}]
  %s3 = inlined_call_operand.vmem [shape: f32[8,6], index: 3, kind: input, shape index: {}]
  %s4 = inlined_call_operand.vmem [shape: f32[464,128], index: 4, kind: input, shape index: {}]
  %s5 = inlined_call_operand.hbm [shape: f32[2,5], index: 5, kind: output, shape index: {}]
  %s6 = sld [smem:[#allocation0]]
  $region30: #{forward.1} parent=0
    _
  %s8 = ssub.s32 1, %s6
  %s9 = scalar_select 0, %s8, %s6
  $region1: #{forward.1} parent=0
    #allocation2 [shape = 'u8[1024]{0}', space=vmem, size = 0x400, scoped, tag = 'output window, operand 0, single buffered']
    #allocation3 [shape = 's32[1]{0}', space=sflag, size = 0x4, scoped, tag = 'scoped memory for forward.1']
    %10 = vsyncpa [#allocation3], 0
    // Predicated region
    $region2: #{forward.1} parent=1 // pred_check
      _
    $region3: #{forward.1} parent=1 // pred_check_branch
      %12 = sbr.rel (0) target = $region5
    $region4: #{forward.1} parent=1 // pred_region
      _
    $region5: #{forward.1} parent=1 // pred_fallthru
      _
    // Predicated region
    $region6: #{forward.1} parent=1 // pred_check
      _
    $region7: #{forward.1} parent=1 // pred_check_branch
      %14 = sbr.rel (0) target = $region9
    $region8: #{forward.1} parent=1 // pred_region
      _
    $region9: #{forward.1} parent=1 // pred_fallthru
      _
    // Predicated region
    $region10: #{forward.1} parent=1 // pred_check
      _
    $region11: #{forward.1} parent=1 // pred_check_branch
      %16 = sbr.rel (0) target = $region13
    $region12: #{forward.1} parent=1 // pred_region
      _
    $region13: #{forward.1} parent=1 // pred_fallthru
      _
    // Predicated region
    $region14: #{forward.1} parent=1 // pred_check
      _
    $region15: #{forward.1} parent=1 // pred_check_branch
      %18 = sbr.rel (0) target = $region17
    $region16: #{forward.1} parent=1 // pred_region
      _
    $region17: #{forward.1} parent=1 // pred_fallthru
      _
    // Predicated region
    $region18: #{forward.1} parent=1 // pred_check
      _
    $region19: #{forward.1} parent=1 // pred_check_branch
      %20 = sbr.rel (0) target = $region21
    $region20: #{forward.1} parent=1 // pred_region
      _
    $region21: #{forward.1} parent=1 // pred_fallthru
      _
    %v21 = vlaneseq
    %v22 = vand.u32 %v21, 127
    %vm23 = vcmp.lt.s32.totalorder %v22, 108
    %v24 = vld [vmem:[%s0] sm:$0xff]
    %v25 = vld [vmem:[%s4] sm:$0xff]
    %v26 = vld [vmem:[%s4 + $0x8] sm:$0xff]
    %v27 = vld [vmem:[%s4 + $0x10] sm:$0xff]
    %v28 = vld [vmem:[%s4 + $0x18] sm:$0xff]
    %v29 = vld [vmem:[%s4 + $0x20] sm:$0xff]
    %v30 = vld [vmem:[%s4 + $0x28] sm:$0xff]
    %v31 = vld [vmem:[%s4 + $0x30] sm:$0xff]
    %v32 = vld [vmem:[%s4 + $0x38] sm:$0xff]
    %v33 = vld [vmem:[%s4 + $0x40] sm:$0xff]
    %v34 = vld [vmem:[%s4 + $0x48] sm:$0xff]
    %v35 = vpack.c.bf16 %v24, %v24
    %v36 = vld [vmem:[%s1] sm:$0xff]
    %v37 = vld [vmem:[%s1 + $0x8] sm:$0xf]
    %v38 = vld [vmem:[%s1 + $0xc] sm:$0xff]
    %v39 = vld [vmem:[%s1 + $0x14] sm:$0xf]
    %v40 = vld [vmem:[%s1 + $0x18] sm:$0xff]
    %v41 = vld [vmem:[%s1 + $0x20] sm:$0xf]
    %v42 = vld [vmem:[%s1 + $0x24] sm:$0xff]
    %v43 = vld [vmem:[%s1 + $0x2c] sm:$0xf]
    %v44 = vld [vmem:[%s1 + $0x30] sm:$0xff]
    %v45 = vld [vmem:[%s1 + $0x38] sm:$0xf]
    %v46 = vld [vmem:[%s1 + $0x3c] sm:$0xff]
    %v47 = vld [vmem:[%s1 + $0x44] sm:$0xf]
    %v48 = vld [vmem:[%s1 + $0x48] sm:$0xff]
    %v49 = vld [vmem:[%s1 + $0x50] sm:$0xf]
    %v50 = vld [vmem:[%s1 + $0x54] sm:$0xff]
    %v51 = vld [vmem:[%s1 + $0x5c] sm:$0xf]
    %v52 = vld [vmem:[%s1 + $0x60] sm:$0xff]
    %v53 = vld [vmem:[%s1 + $0x68] sm:$0xf]
    %v54 = vld [vmem:[%s1 + $0x6c] sm:$0xff]
    %v55 = vld [vmem:[%s1 + $0x74] sm:$0xf]
    %v56 = vld [vmem:[%s1 + $0x78] sm:$0xff]
    %v57 = vld [vmem:[%s1 + $0x80] sm:$0xf]
    %v58 = vld [vmem:[%s1 + $0x84] sm:$0xff]
    %v59 = vld [vmem:[%s1 + $0x8c] sm:$0xf]
    %v60 = vld [vmem:[%s1 + $0x90] sm:$0xff]
    %v61 = vld [vmem:[%s1 + $0x98] sm:$0xf]
    %v62 = vld [vmem:[%s1 + $0x9c] sm:$0xff]
    %v63 = vld [vmem:[%s1 + $0xa4] sm:$0xf]
    %v64 = vld [vmem:[%s1 + $0xa8] sm:$0xff]
    %v65 = vld [vmem:[%s1 + $0xb0] sm:$0xf]
    %v66 = vld [vmem:[%s1 + $0xb4] sm:$0xff]
    %v67 = vld [vmem:[%s1 + $0xbc] sm:$0xf]
    %v100 = vunpack.c.l.b16 %v36
    %v101 = vunpack.c.h.b16 %v36
    %v102 = vunpack.c.l.b16 %v37
    %v103 = vunpack.c.l.b16 %v38
    %v104 = vunpack.c.h.b16 %v38
    %v105 = vunpack.c.l.b16 %v39
    %v106 = vunpack.c.l.b16 %v40
    %v107 = vunpack.c.h.b16 %v40
    %v108 = vunpack.c.l.b16 %v41
    %v109 = vunpack.c.l.b16 %v42
    %v110 = vunpack.c.h.b16 %v42
    %v111 = vunpack.c.l.b16 %v43
    %v112 = vunpack.c.l.b16 %v44
    %v113 = vunpack.c.h.b16 %v44
    %v114 = vunpack.c.l.b16 %v45
    %v115 = vunpack.c.l.b16 %v46
    %v116 = vunpack.c.h.b16 %v46
    %v117 = vunpack.c.l.b16 %v47
    %v118 = vunpack.c.l.b16 %v48
    %v119 = vunpack.c.h.b16 %v48
    %v120 = vunpack.c.l.b16 %v49
    %v121 = vunpack.c.l.b16 %v50
    %v122 = vunpack.c.h.b16 %v50
    %v123 = vunpack.c.l.b16 %v51
    %v124 = vunpack.c.l.b16 %v52
    %v125 = vunpack.c.h.b16 %v52
    %v126 = vunpack.c.l.b16 %v53
    %v127 = vunpack.c.l.b16 %v54
    %v128 = vunpack.c.h.b16 %v54
    %v129 = vunpack.c.l.b16 %v55
    %v130 = vunpack.c.l.b16 %v56
    %v131 = vunpack.c.h.b16 %v56
    %v132 = vunpack.c.l.b16 %v57
    %v133 = vunpack.c.l.b16 %v58
    %v134 = vunpack.c.h.b16 %v58
    %v135 = vunpack.c.l.b16 %v59
    %v136 = vunpack.c.l.b16 %v60
    %v137 = vunpack.c.h.b16 %v60
    %v138 = vunpack.c.l.b16 %v61
    %v139 = vunpack.c.l.b16 %v62
    %v140 = vunpack.c.h.b16 %v62
    %v141 = vunpack.c.l.b16 %v63
    %v142 = vunpack.c.l.b16 %v64
    %v143 = vunpack.c.h.b16 %v64
    %v144 = vunpack.c.l.b16 %v65
    %v145 = vunpack.c.l.b16 %v66
    %v146 = vunpack.c.h.b16 %v66
    %v147 = vunpack.c.l.b16 %v67
    %v148 = vpack.c.b16 %v103, %v100
    %v149 = vpack.c.b16 %v104, %v101
    %v150 = vpack.c.b16 %v105, %v102
    %v151 = vpack.c.b16 %v109, %v106
    %v152 = vpack.c.b16 %v110, %v107
    %v153 = vpack.c.b16 %v111, %v108
    %v154 = vpack.c.b16 %v115, %v112
    %v155 = vpack.c.b16 %v116, %v113
    %v156 = vpack.c.b16 %v117, %v114
    %v157 = vpack.c.b16 %v121, %v118
    %v158 = vpack.c.b16 %v122, %v119
    %v159 = vpack.c.b16 %v123, %v120
    %v160 = vpack.c.b16 %v127, %v124
    %v161 = vpack.c.b16 %v128, %v125
    %v162 = vpack.c.b16 %v129, %v126
    %v163 = vpack.c.b16 %v133, %v130
    %v164 = vpack.c.b16 %v134, %v131
    %v165 = vpack.c.b16 %v135, %v132
    %v166 = vpack.c.b16 %v139, %v136
    %v167 = vpack.c.b16 %v140, %v137
    %v168 = vpack.c.b16 %v141, %v138
    %v169 = vpack.c.b16 %v145, %v142
    %v170 = vpack.c.b16 %v146, %v143
    %v171 = vpack.c.b16 %v147, %v144
    %196 = vmatpush.bf16.msra.mxu0 %v169
    %197 = vmatpush.bf16.msra.mxu0 %v166
    %198 = vmatpush.bf16.msra.mxu0 %v163
    %199 = vmatpush.bf16.msra.mxu0 %v160
    %200 = vmatpush.bf16.msra.mxu0 %v157
    %201 = vmatpush.bf16.msra.mxu0 %v154
    %202 = vmatpush.bf16.msra.mxu0 %v151
    %203 = vmatpush.bf16.msra.mxu0 %v148
    %204 = vmatmul.bf16.gmra.mxu0 %v35
    %v205 = vpop.f32.mrf.mxu0
    %v206 = vadd.f32 0.0, %v205
    %v207 = vpop.f32.mrf.mxu0
    %208 = vdwg.mxu0
    %209 = vmatpush.bf16.msra.mxu0 %v170
    %210 = vmatpush.bf16.msra.mxu0 %v167
    %211 = vmatpush.bf16.msra.mxu0 %v164
    %212 = vmatpush.bf16.msra.mxu0 %v161
    %213 = vmatpush.bf16.msra.mxu0 %v158
    %214 = vmatpush.bf16.msra.mxu0 %v155
    %215 = vmatpush.bf16.msra.mxu0 %v152
    %216 = vmatpush.bf16.msra.mxu0 %v149
    %217 = vmatmul.bf16.gmra.mxu0 %v35
    %v218 = vpop.f32.mrf.mxu0
    %v219 = vadd.f32 0.0, %v218
    %v220 = vpop.f32.mrf.mxu0
    %221 = vdwg.mxu0
    %222 = vmatpush.bf16.msra.mxu0 %v171
    %223 = vmatpush.bf16.msra.mxu0 %v168
    %224 = vmatpush.bf16.msra.mxu0 %v165
    %225 = vmatpush.bf16.msra.mxu0 %v162
    %226 = vmatpush.bf16.msra.mxu0 %v159
    %227 = vmatpush.bf16.msra.mxu0 %v156
    %228 = vmatpush.bf16.msra.mxu0 %v153
    %229 = vmatpush.bf16.msra.mxu0 %v150
    %230 = vmatmul.bf16.gmra.mxu0 %v35
    %v231 = vpop.f32.mrf.mxu0
    %v232 = vadd.f32 0.0, %v231
    %v233 = vpop.f32.mrf.mxu0
    %234 = vdwg.mxu0
    %vm235 = vcmask 64512
    %v237 = vsel %vm235, %v27, 0
    %v240 = vsel %vm235, %v28, 0
    %242 = vmatpush.msra.mxu0 0.0
    %243 = vmatpush.msra.mxu0 0.0
    %244 = vmatpush.msra.mxu0 0.0
    %245 = vmatpush.msra.mxu0 0.0
    %246 = vmatpush.msra.mxu0 0.0
    %247 = vmatpush.msra.mxu0 0.0
    %248 = vmatpush.msra.mxu0 0.0
    %249 = vmatpush.msra.mxu0 0.0
    %250 = vmatpush.msra.mxu0 0.0
    %251 = vmatpush.msra.mxu0 0.0
    %252 = vmatpush.msra.mxu0 0.0
    %253 = vmatpush.msra.mxu0 0.0
    %254 = vmatpush.msra.mxu0 0.0
    %255 = vmatpush.msra.mxu0 0.0
    %256 = vmatpush.msra.mxu0 0.0
    %257 = vmatpush.msra.mxu0 %v206
    %258 = vmatmul.f32.gmra.mxu0 %v237
    %v259 = vpop.f32.mrf.mxu0
    %v260 = vadd.f32 0.0, %v259
    %261 = vmatmul.f32.gmra.mxu0 %v240
    %v262 = vpop.f32.mrf.mxu0
    %v263 = vadd.f32 0.0, %v262
    %264 = vdwg.mxu0
    %v266 = vsel %vm235, %v25, 0
    %v269 = vsel %vm235, %v26, 0
    %271 = vmatpush.msra.mxu0 0.0
    %272 = vmatpush.msra.mxu0 0.0
    %273 = vmatpush.msra.mxu0 0.0
    %274 = vmatpush.msra.mxu0 0.0
    %275 = vmatpush.msra.mxu0 0.0
    %276 = vmatpush.msra.mxu0 0.0
    %277 = vmatpush.msra.mxu0 0.0
    %278 = vmatpush.msra.mxu0 0.0
    %279 = vmatpush.msra.mxu0 0.0
    %280 = vmatpush.msra.mxu0 0.0
    %281 = vmatpush.msra.mxu0 0.0
    %282 = vmatpush.msra.mxu0 0.0
    %283 = vmatpush.msra.mxu0 0.0
    %284 = vmatpush.msra.mxu0 0.0
    %285 = vmatpush.msra.mxu0 0.0
    %286 = vmatpush.msra.mxu0 %v24
    %287 = vmatmul.f32.gmra.mxu0 %v266
    %v288 = vpop.f32.mrf.mxu0
    %v289 = vadd.f32 %v260, %v288
    %290 = vmatmul.f32.gmra.mxu0 %v269
    %v291 = vpop.f32.mrf.mxu0
    %v292 = vadd.f32 %v263, %v291
    %293 = vdwg.mxu0
    %v295 = vsel %vm235, %v29, 0
    %v298 = vsel %vm235, %v30, 0
    %300 = vmatpush.msra.mxu0 0.0
    %301 = vmatpush.msra.mxu0 0.0
    %302 = vmatpush.msra.mxu0 0.0
    %303 = vmatpush.msra.mxu0 0.0
    %304 = vmatpush.msra.mxu0 0.0
    %305 = vmatpush.msra.mxu0 0.0
    %306 = vmatpush.msra.mxu0 0.0
    %307 = vmatpush.msra.mxu0 0.0
    %308 = vmatpush.msra.mxu0 0.0
    %309 = vmatpush.msra.mxu0 0.0
    %310 = vmatpush.msra.mxu0 0.0
    %311 = vmatpush.msra.mxu0 0.0
    %312 = vmatpush.msra.mxu0 0.0
    %313 = vmatpush.msra.mxu0 0.0
    %314 = vmatpush.msra.mxu0 0.0
    %315 = vmatpush.msra.mxu0 %v219
    %316 = vmatmul.f32.gmra.mxu0 %v295
    %v317 = vpop.f32.mrf.mxu0
    %v318 = vadd.f32 0.0, %v317
    %319 = vmatmul.f32.gmra.mxu0 %v298
    %v320 = vpop.f32.mrf.mxu0
    %v321 = vadd.f32 0.0, %v320
    %322 = vdwg.mxu0
    %v323 = vadd.f32 %v289, %v318
    %v324 = vadd.f32 %v292, %v321
    %v326 = vsel %vm235, %v31, 0
    %v329 = vsel %vm235, %v32, 0
    %331 = vmatpush.msra.mxu0 0.0
    %332 = vmatpush.msra.mxu0 0.0
    %333 = vmatpush.msra.mxu0 0.0
    %334 = vmatpush.msra.mxu0 0.0
    %335 = vmatpush.msra.mxu0 0.0
    %336 = vmatpush.msra.mxu0 0.0
    %337 = vmatpush.msra.mxu0 0.0
    %338 = vmatpush.msra.mxu0 0.0
    %339 = vmatpush.msra.mxu0 0.0
    %340 = vmatpush.msra.mxu0 0.0
    %341 = vmatpush.msra.mxu0 0.0
    %342 = vmatpush.msra.mxu0 0.0
    %343 = vmatpush.msra.mxu0 0.0
    %344 = vmatpush.msra.mxu0 0.0
    %345 = vmatpush.msra.mxu0 0.0
    %346 = vmatpush.msra.mxu0 %v232
    %347 = vmatmul.f32.gmra.mxu0 %v326
    %v348 = vpop.f32.mrf.mxu0
    %v349 = vadd.f32 0.0, %v348
    %350 = vmatmul.f32.gmra.mxu0 %v329
    %v351 = vpop.f32.mrf.mxu0
    %v352 = vadd.f32 0.0, %v351
    %353 = vdwg.mxu0
    %v354 = vadd.f32 %v323, %v349
    %v355 = vadd.f32 %v324, %v352
    %v356 = vadd.f32 %v354, %v33
    %v357 = vadd.f32 %v355, %v34
    %v358 = vmax.f32 %v356, 0.0
    %v359 = vmax.f32 %v357, 0.0
    %v360 = vsel %vm23, 1, 0
    %vm361 = vcmp.eq.s32.totalorder %v360, 1
    %v362 = vsel %vm361, %v358, 0.0
    %v363 = vsel %vm361, %v359, 0.0
    %v364 = vld [vmem:[%s4 + $0x50] sm:$0xf]
    %v365 = vld [vmem:[%s4 + $0x58] sm:$0xf]
    %v366 = vld [vmem:[%s4 + $0x60] sm:$0xf]
    %v367 = vld [vmem:[%s4 + $0x68] sm:$0xf]
    %v368 = vld [vmem:[%s4 + $0x70] sm:$0xf]
    %v369 = vpack.c.bf16 %v363, %v362
    %370 = vmatpush.bf16.msra.mxu0 %v169
    %371 = vmatpush.bf16.msra.mxu0 %v166
    %372 = vmatpush.bf16.msra.mxu0 %v163
    %373 = vmatpush.bf16.msra.mxu0 %v160
    %374 = vmatpush.bf16.msra.mxu0 %v157
    %375 = vmatpush.bf16.msra.mxu0 %v154
    %376 = vmatpush.bf16.msra.mxu0 %v151
    %377 = vmatpush.bf16.msra.mxu0 %v148
    %378 = vmatmul.bf16.gmra.mxu0 %v369
    %v379 = vpop.f32.mrf.mxu0
    %v380 = vadd.f32 0.0, %v379
    %v381 = vpop.f32.mrf.mxu0
    %v382 = vadd.f32 0.0, %v381
    %383 = vdwg.mxu0
    %384 = vmatpush.bf16.msra.mxu0 %v170
    %385 = vmatpush.bf16.msra.mxu0 %v167
    %386 = vmatpush.bf16.msra.mxu0 %v164
    %387 = vmatpush.bf16.msra.mxu0 %v161
    %388 = vmatpush.bf16.msra.mxu0 %v158
    %389 = vmatpush.bf16.msra.mxu0 %v155
    %390 = vmatpush.bf16.msra.mxu0 %v152
    %391 = vmatpush.bf16.msra.mxu0 %v149
    %392 = vmatmul.bf16.gmra.mxu0 %v369
    %v393 = vpop.f32.mrf.mxu0
    %v394 = vadd.f32 0.0, %v393
    %v395 = vpop.f32.mrf.mxu0
    %v396 = vadd.f32 0.0, %v395
    %397 = vdwg.mxu0
    %398 = vmatpush.bf16.msra.mxu0 %v171
    %399 = vmatpush.bf16.msra.mxu0 %v168
    %400 = vmatpush.bf16.msra.mxu0 %v165
    %401 = vmatpush.bf16.msra.mxu0 %v162
    %402 = vmatpush.bf16.msra.mxu0 %v159
    %403 = vmatpush.bf16.msra.mxu0 %v156
    %404 = vmatpush.bf16.msra.mxu0 %v153
    %405 = vmatpush.bf16.msra.mxu0 %v150
    %406 = vmatmul.bf16.gmra.mxu0 %v369
    %v407 = vpop.f32.mrf.mxu0
    %v408 = vadd.f32 0.0, %v407
    %v409 = vpop.f32.mrf.mxu0
    %v410 = vadd.f32 0.0, %v409
    %411 = vdwg.mxu0
    %vm412 = vcmask 130048
    %v414 = vsel %vm412, %v365, 0
    %416 = vmatpush.msra.mxu0 0.0
    %417 = vmatpush.msra.mxu0 0.0
    %418 = vmatpush.msra.mxu0 0.0
    %419 = vmatpush.msra.mxu0 0.0
    %420 = vmatpush.msra.mxu0 0.0
    %421 = vmatpush.msra.mxu0 0.0
    %422 = vmatpush.msra.mxu0 0.0
    %423 = vmatpush.msra.mxu0 0.0
    %424 = vmatpush.msra.mxu0 0.0
    %425 = vmatpush.msra.mxu0 0.0
    %426 = vmatpush.msra.mxu0 0.0
    %427 = vmatpush.msra.mxu0 0.0
    %428 = vmatpush.msra.mxu0 0.0
    %429 = vmatpush.msra.mxu0 0.0
    %430 = vmatpush.msra.mxu0 %v382
    %431 = vmatpush.msra.mxu0 %v380
    %432 = vmatmul.f32.gmra.mxu0 %v414
    %v433 = vpop.f32.mrf.mxu0
    %v434 = vadd.f32 0.0, %v433
    %435 = vdwg.mxu0
    %v437 = vsel %vm412, %v364, 0
    %439 = vmatpush.msra.mxu0 0.0
    %440 = vmatpush.msra.mxu0 0.0
    %441 = vmatpush.msra.mxu0 0.0
    %442 = vmatpush.msra.mxu0 0.0
    %443 = vmatpush.msra.mxu0 0.0
    %444 = vmatpush.msra.mxu0 0.0
    %445 = vmatpush.msra.mxu0 0.0
    %446 = vmatpush.msra.mxu0 0.0
    %447 = vmatpush.msra.mxu0 0.0
    %448 = vmatpush.msra.mxu0 0.0
    %449 = vmatpush.msra.mxu0 0.0
    %450 = vmatpush.msra.mxu0 0.0
    %451 = vmatpush.msra.mxu0 0.0
    %452 = vmatpush.msra.mxu0 0.0
    %453 = vmatpush.msra.mxu0 %v363
    %454 = vmatpush.msra.mxu0 %v362
    %455 = vmatmul.f32.gmra.mxu0 %v437
    %v456 = vpop.f32.mrf.mxu0
    %v457 = vadd.f32 %v434, %v456
    %458 = vdwg.mxu0
    %v460 = vsel %vm412, %v366, 0
    %462 = vmatpush.msra.mxu0 0.0
    %463 = vmatpush.msra.mxu0 0.0
    %464 = vmatpush.msra.mxu0 0.0
    %465 = vmatpush.msra.mxu0 0.0
    %466 = vmatpush.msra.mxu0 0.0
    %467 = vmatpush.msra.mxu0 0.0
    %468 = vmatpush.msra.mxu0 0.0
    %469 = vmatpush.msra.mxu0 0.0
    %470 = vmatpush.msra.mxu0 0.0
    %471 = vmatpush.msra.mxu0 0.0
    %472 = vmatpush.msra.mxu0 0.0
    %473 = vmatpush.msra.mxu0 0.0
    %474 = vmatpush.msra.mxu0 0.0
    %475 = vmatpush.msra.mxu0 0.0
    %476 = vmatpush.msra.mxu0 %v396
    %477 = vmatpush.msra.mxu0 %v394
    %478 = vmatmul.f32.gmra.mxu0 %v460
    %v479 = vpop.f32.mrf.mxu0
    %v480 = vadd.f32 0.0, %v479
    %481 = vdwg.mxu0
    %v482 = vadd.f32 %v457, %v480
    %v484 = vsel %vm412, %v367, 0
    %486 = vmatpush.msra.mxu0 0.0
    %487 = vmatpush.msra.mxu0 0.0
    %488 = vmatpush.msra.mxu0 0.0
    %489 = vmatpush.msra.mxu0 0.0
    %490 = vmatpush.msra.mxu0 0.0
    %491 = vmatpush.msra.mxu0 0.0
    %492 = vmatpush.msra.mxu0 0.0
    %493 = vmatpush.msra.mxu0 0.0
    %494 = vmatpush.msra.mxu0 0.0
    %495 = vmatpush.msra.mxu0 0.0
    %496 = vmatpush.msra.mxu0 0.0
    %497 = vmatpush.msra.mxu0 0.0
    %498 = vmatpush.msra.mxu0 0.0
    %499 = vmatpush.msra.mxu0 0.0
    %500 = vmatpush.msra.mxu0 %v410
    %501 = vmatpush.msra.mxu0 %v408
    %502 = vmatmul.f32.gmra.mxu0 %v484
    %v503 = vpop.f32.mrf.mxu0
    %v504 = vadd.f32 0.0, %v503
    %505 = vdwg.mxu0
    %v506 = vadd.f32 %v482, %v504
    %v507 = vadd.f32 %v506, %v368
    %v508 = vmax.f32 %v507, 0.0
    %v509 = vsel %vm361, %v508, 0.0
    %v510 = vld [vmem:[%s4 + $0x78] sm:$0xff]
    %v511 = vperm.slane %v509, 0
    %v512 = vmul.f32 %v510, %v511
    %v513 = vpack.c.bf16 %v512, %v512
    %v514 = vld [vmem:[%s2] sm:$0xf]
    %v515 = vld [vmem:[%s2 + $0x4] sm:$0xf]
    %v516 = vld [vmem:[%s2 + $0x8] sm:$0xf]
    %v517 = vld [vmem:[%s2 + $0xc] sm:$0xf]
    %v518 = vld [vmem:[%s2 + $0x10] sm:$0xf]
    %v519 = vld [vmem:[%s2 + $0x14] sm:$0xf]
    %v520 = vld [vmem:[%s2 + $0x18] sm:$0xf]
    %v521 = vld [vmem:[%s2 + $0x1c] sm:$0xf]
    %v522 = vld [vmem:[%s2 + $0x20] sm:$0xf]
    %v523 = vld [vmem:[%s2 + $0x24] sm:$0xf]
    %v524 = vld [vmem:[%s2 + $0x28] sm:$0xf]
    %v525 = vld [vmem:[%s2 + $0x2c] sm:$0xf]
    %v526 = vld [vmem:[%s2 + $0x30] sm:$0xf]
    %v527 = vld [vmem:[%s2 + $0x34] sm:$0xf]
    %v528 = vld [vmem:[%s2 + $0x38] sm:$0xf]
    %v529 = vld [vmem:[%s2 + $0x3c] sm:$0xf]
    %v530 = vperm.slane %v509, 1
    %v531 = vmul.f32 %v510, %v530
    %v532 = vpack.c.bf16 %v531, %v531
    %s533 = scalar_lea.vmem %s2, 64
    %v534 = vld [vmem:[%s533] sm:$0xf]
    %v535 = vld [vmem:[%s533 + $0x4] sm:$0xf]
    %v536 = vld [vmem:[%s533 + $0x8] sm:$0xf]
    %v537 = vld [vmem:[%s533 + $0xc] sm:$0xf]
    %v538 = vld [vmem:[%s533 + $0x10] sm:$0xf]
    %v539 = vld [vmem:[%s533 + $0x14] sm:$0xf]
    %v540 = vld [vmem:[%s533 + $0x18] sm:$0xf]
    %v541 = vld [vmem:[%s533 + $0x1c] sm:$0xf]
    %v542 = vld [vmem:[%s533 + $0x20] sm:$0xf]
    %v543 = vld [vmem:[%s533 + $0x24] sm:$0xf]
    %v544 = vld [vmem:[%s533 + $0x28] sm:$0xf]
    %v545 = vld [vmem:[%s533 + $0x2c] sm:$0xf]
    %v546 = vld [vmem:[%s533 + $0x30] sm:$0xf]
    %v547 = vld [vmem:[%s533 + $0x34] sm:$0xf]
    %v548 = vld [vmem:[%s533 + $0x38] sm:$0xf]
    %v549 = vld [vmem:[%s533 + $0x3c] sm:$0xf]
    %v566 = vunpack.c.l.b16 %v534
    %v567 = vunpack.c.l.b16 %v535
    %v568 = vunpack.c.l.b16 %v536
    %v569 = vunpack.c.l.b16 %v537
    %v570 = vunpack.c.l.b16 %v538
    %v571 = vunpack.c.l.b16 %v539
    %v572 = vunpack.c.l.b16 %v540
    %v573 = vunpack.c.l.b16 %v541
    %v574 = vunpack.c.l.b16 %v542
    %v575 = vunpack.c.l.b16 %v543
    %v576 = vunpack.c.l.b16 %v544
    %v577 = vunpack.c.l.b16 %v545
    %v578 = vunpack.c.l.b16 %v546
    %v579 = vunpack.c.l.b16 %v547
    %v580 = vunpack.c.l.b16 %v548
    %v581 = vunpack.c.l.b16 %v549
    %v582 = vpack.c.b16 %v567, %v566
    %v583 = vpack.c.b16 %v569, %v568
    %v584 = vpack.c.b16 %v571, %v570
    %v585 = vpack.c.b16 %v573, %v572
    %v586 = vpack.c.b16 %v575, %v574
    %v587 = vpack.c.b16 %v577, %v576
    %v588 = vpack.c.b16 %v579, %v578
    %v589 = vpack.c.b16 %v581, %v580
    %598 = vmatpush.bf16.msra.mxu0 %v589
    %599 = vmatpush.bf16.msra.mxu0 %v588
    %600 = vmatpush.bf16.msra.mxu0 %v587
    %601 = vmatpush.bf16.msra.mxu0 %v586
    %602 = vmatpush.bf16.msra.mxu0 %v585
    %603 = vmatpush.bf16.msra.mxu0 %v584
    %604 = vmatpush.bf16.msra.mxu0 %v583
    %605 = vmatpush.bf16.msra.mxu0 %v582
    %606 = vmatmul.bf16.gmra.mxu0 %v532
    %v607 = vpop.f32.mrf.mxu0
    %v608 = vadd.f32 0.0, %v607
    %v609 = vpop.f32.mrf.mxu0
    %610 = vdwg.mxu0
    %v627 = vunpack.c.l.b16 %v514
    %v628 = vunpack.c.l.b16 %v515
    %v629 = vunpack.c.l.b16 %v516
    %v630 = vunpack.c.l.b16 %v517
    %v631 = vunpack.c.l.b16 %v518
    %v632 = vunpack.c.l.b16 %v519
    %v633 = vunpack.c.l.b16 %v520
    %v634 = vunpack.c.l.b16 %v521
    %v635 = vunpack.c.l.b16 %v522
    %v636 = vunpack.c.l.b16 %v523
    %v637 = vunpack.c.l.b16 %v524
    %v638 = vunpack.c.l.b16 %v525
    %v639 = vunpack.c.l.b16 %v526
    %v640 = vunpack.c.l.b16 %v527
    %v641 = vunpack.c.l.b16 %v528
    %v642 = vunpack.c.l.b16 %v529
    %v643 = vpack.c.b16 %v628, %v627
    %v644 = vpack.c.b16 %v630, %v629
    %v645 = vpack.c.b16 %v632, %v631
    %v646 = vpack.c.b16 %v634, %v633
    %v647 = vpack.c.b16 %v636, %v635
    %v648 = vpack.c.b16 %v638, %v637
    %v649 = vpack.c.b16 %v640, %v639
    %v650 = vpack.c.b16 %v642, %v641
    %659 = vmatpush.bf16.msra.mxu0 %v650
    %660 = vmatpush.bf16.msra.mxu0 %v649
    %661 = vmatpush.bf16.msra.mxu0 %v648
    %662 = vmatpush.bf16.msra.mxu0 %v647
    %663 = vmatpush.bf16.msra.mxu0 %v646
    %664 = vmatpush.bf16.msra.mxu0 %v645
    %665 = vmatpush.bf16.msra.mxu0 %v644
    %666 = vmatpush.bf16.msra.mxu0 %v643
    %667 = vmatmul.bf16.gmra.mxu0 %v513
    %v668 = vpop.f32.mrf.mxu0
    %v669 = vadd.f32 %v608, %v668
    %v670 = vpop.f32.mrf.mxu0
    %671 = vdwg.mxu0
    %v672 = vperm.slane %v509, 2
    %v673 = vmul.f32 %v510, %v672
    %v674 = vpack.c.bf16 %v673, %v673
    %s675 = scalar_lea.vmem %s2, 128
    %v676 = vld [vmem:[%s675] sm:$0xf]
    %v677 = vld [vmem:[%s675 + $0x4] sm:$0xf]
    %v678 = vld [vmem:[%s675 + $0x8] sm:$0xf]
    %v679 = vld [vmem:[%s675 + $0xc] sm:$0xf]
    %v680 = vld [vmem:[%s675 + $0x10] sm:$0xf]
    %v681 = vld [vmem:[%s675 + $0x14] sm:$0xf]
    %v682 = vld [vmem:[%s675 + $0x18] sm:$0xf]
    %v683 = vld [vmem:[%s675 + $0x1c] sm:$0xf]
    %v684 = vld [vmem:[%s675 + $0x20] sm:$0xf]
    %v685 = vld [vmem:[%s675 + $0x24] sm:$0xf]
    %v686 = vld [vmem:[%s675 + $0x28] sm:$0xf]
    %v687 = vld [vmem:[%s675 + $0x2c] sm:$0xf]
    %v688 = vld [vmem:[%s675 + $0x30] sm:$0xf]
    %v689 = vld [vmem:[%s675 + $0x34] sm:$0xf]
    %v690 = vld [vmem:[%s675 + $0x38] sm:$0xf]
    %v691 = vld [vmem:[%s675 + $0x3c] sm:$0xf]
    %v708 = vunpack.c.l.b16 %v676
    %v709 = vunpack.c.l.b16 %v677
    %v710 = vunpack.c.l.b16 %v678
    %v711 = vunpack.c.l.b16 %v679
    %v712 = vunpack.c.l.b16 %v680
    %v713 = vunpack.c.l.b16 %v681
    %v714 = vunpack.c.l.b16 %v682
    %v715 = vunpack.c.l.b16 %v683
    %v716 = vunpack.c.l.b16 %v684
    %v717 = vunpack.c.l.b16 %v685
    %v718 = vunpack.c.l.b16 %v686
    %v719 = vunpack.c.l.b16 %v687
    %v720 = vunpack.c.l.b16 %v688
    %v721 = vunpack.c.l.b16 %v689
    %v722 = vunpack.c.l.b16 %v690
    %v723 = vunpack.c.l.b16 %v691
    %v724 = vpack.c.b16 %v709, %v708
    %v725 = vpack.c.b16 %v711, %v710
    %v726 = vpack.c.b16 %v713, %v712
    %v727 = vpack.c.b16 %v715, %v714
    %v728 = vpack.c.b16 %v717, %v716
    %v729 = vpack.c.b16 %v719, %v718
    %v730 = vpack.c.b16 %v721, %v720
    %v731 = vpack.c.b16 %v723, %v722
    %740 = vmatpush.bf16.msra.mxu0 %v731
    %741 = vmatpush.bf16.msra.mxu0 %v730
    %742 = vmatpush.bf16.msra.mxu0 %v729
    %743 = vmatpush.bf16.msra.mxu0 %v728
    %744 = vmatpush.bf16.msra.mxu0 %v727
    %745 = vmatpush.bf16.msra.mxu0 %v726
    %746 = vmatpush.bf16.msra.mxu0 %v725
    %747 = vmatpush.bf16.msra.mxu0 %v724
    %748 = vmatmul.bf16.gmra.mxu0 %v674
    %v749 = vpop.f32.mrf.mxu0
    %v750 = vadd.f32 0.0, %v749
    %v751 = vpop.f32.mrf.mxu0
    %752 = vdwg.mxu0
    %v753 = vadd.f32 %v669, %v750
    %v754 = vperm.slane %v509, 3
    %v755 = vmul.f32 %v510, %v754
    %v756 = vpack.c.bf16 %v755, %v755
    %s757 = scalar_lea.vmem %s2, 192
    %v758 = vld [vmem:[%s757] sm:$0xf]
    %v759 = vld [vmem:[%s757 + $0x4] sm:$0xf]
    %v760 = vld [vmem:[%s757 + $0x8] sm:$0xf]
    %v761 = vld [vmem:[%s757 + $0xc] sm:$0xf]
    %v762 = vld [vmem:[%s757 + $0x10] sm:$0xf]
    %v763 = vld [vmem:[%s757 + $0x14] sm:$0xf]
    %v764 = vld [vmem:[%s757 + $0x18] sm:$0xf]
    %v765 = vld [vmem:[%s757 + $0x1c] sm:$0xf]
    %v766 = vld [vmem:[%s757 + $0x20] sm:$0xf]
    %v767 = vld [vmem:[%s757 + $0x24] sm:$0xf]
    %v768 = vld [vmem:[%s757 + $0x28] sm:$0xf]
    %v769 = vld [vmem:[%s757 + $0x2c] sm:$0xf]
    %v770 = vld [vmem:[%s757 + $0x30] sm:$0xf]
    %v771 = vld [vmem:[%s757 + $0x34] sm:$0xf]
    %v772 = vld [vmem:[%s757 + $0x38] sm:$0xf]
    %v773 = vld [vmem:[%s757 + $0x3c] sm:$0xf]
    %v790 = vunpack.c.l.b16 %v758
    %v791 = vunpack.c.l.b16 %v759
    %v792 = vunpack.c.l.b16 %v760
    %v793 = vunpack.c.l.b16 %v761
    %v794 = vunpack.c.l.b16 %v762
    %v795 = vunpack.c.l.b16 %v763
    %v796 = vunpack.c.l.b16 %v764
    %v797 = vunpack.c.l.b16 %v765
    %v798 = vunpack.c.l.b16 %v766
    %v799 = vunpack.c.l.b16 %v767
    %v800 = vunpack.c.l.b16 %v768
    %v801 = vunpack.c.l.b16 %v769
    %v802 = vunpack.c.l.b16 %v770
    %v803 = vunpack.c.l.b16 %v771
    %v804 = vunpack.c.l.b16 %v772
    %v805 = vunpack.c.l.b16 %v773
    %v806 = vpack.c.b16 %v791, %v790
    %v807 = vpack.c.b16 %v793, %v792
    %v808 = vpack.c.b16 %v795, %v794
    %v809 = vpack.c.b16 %v797, %v796
    %v810 = vpack.c.b16 %v799, %v798
    %v811 = vpack.c.b16 %v801, %v800
    %v812 = vpack.c.b16 %v803, %v802
    %v813 = vpack.c.b16 %v805, %v804
    %822 = vmatpush.bf16.msra.mxu0 %v813
    %823 = vmatpush.bf16.msra.mxu0 %v812
    %824 = vmatpush.bf16.msra.mxu0 %v811
    %825 = vmatpush.bf16.msra.mxu0 %v810
    %826 = vmatpush.bf16.msra.mxu0 %v809
    %827 = vmatpush.bf16.msra.mxu0 %v808
    %828 = vmatpush.bf16.msra.mxu0 %v807
    %829 = vmatpush.bf16.msra.mxu0 %v806
    %830 = vmatmul.bf16.gmra.mxu0 %v756
    %v831 = vpop.f32.mrf.mxu0
    %v832 = vadd.f32 0.0, %v831
    %v833 = vpop.f32.mrf.mxu0
    %834 = vdwg.mxu0
    %v835 = vadd.f32 %v753, %v832
    %v836 = vld [vmem:[%s3] sm:$0xff]
    %v837 = vld [vmem:[%s4 + $0x90] sm:$0x3f]
    %v838 = vld [vmem:[%s4 + $0x98] sm:$0x1]
    %v839 = vperm.slane %v838, 0
    %vm840 = vcmask 48128
    %v842 = vsel %vm840, %v836, 0
    %vm844 = vcmask 1045504
    %v846 = vsel %vm844, %v837, 0
    %848 = vmatpush.msra.mxu0 0.0
    %849 = vmatpush.msra.mxu0 0.0
    %850 = vmatpush.msra.mxu0 0.0
    %851 = vmatpush.msra.mxu0 0.0
    %852 = vmatpush.msra.mxu0 0.0
    %853 = vmatpush.msra.mxu0 0.0
    %854 = vmatpush.msra.mxu0 0.0
    %855 = vmatpush.msra.mxu0 0.0
    %856 = vmatpush.msra.mxu0 0.0
    %857 = vmatpush.msra.mxu0 0.0
    %858 = vmatpush.msra.mxu0 0.0
    %859 = vmatpush.msra.mxu0 0.0
    %860 = vmatpush.msra.mxu0 0.0
    %861 = vmatpush.msra.mxu0 0.0
    %862 = vmatpush.msra.mxu0 0.0
    %863 = vmatpush.msra.mxu0 %v846
    %864 = vmatmul.f32.gmra.mxu0 %v842
    %v865 = vpop.f32.mrf.mxu0
    %v866 = vadd.f32 %v839, %v865
    %867 = vdwg.mxu0
    %v868 = vmax.f32 %v866, 0.0
    %v869 = vld [vmem:[%s4 + $0xa0] sm:$0xff]
    %v870 = vld [vmem:[%s4 + $0xa8] sm:$0x1]
    %v871 = vperm.slane %v870, 0
    %v873 = vsel %vm235, %v868, 0
    %875 = vmatpush.msra.mxu0 0.0
    %876 = vmatpush.msra.mxu0 0.0
    %877 = vmatpush.msra.mxu0 0.0
    %878 = vmatpush.msra.mxu0 0.0
    %879 = vmatpush.msra.mxu0 0.0
    %880 = vmatpush.msra.mxu0 0.0
    %881 = vmatpush.msra.mxu0 0.0
    %882 = vmatpush.msra.mxu0 0.0
    %883 = vmatpush.msra.mxu0 0.0
    %884 = vmatpush.msra.mxu0 0.0
    %885 = vmatpush.msra.mxu0 0.0
    %886 = vmatpush.msra.mxu0 0.0
    %887 = vmatpush.msra.mxu0 0.0
    %888 = vmatpush.msra.mxu0 0.0
    %889 = vmatpush.msra.mxu0 0.0
    %890 = vmatpush.msra.mxu0 %v869
    %891 = vmatmul.f32.gmra.mxu0 %v873
    %v892 = vpop.f32.mrf.mxu0
    %v893 = vadd.f32 %v871, %v892
    %894 = vdwg.mxu0
    %v895 = vmax.f32 %v893, 0.0
    %v896 = vld [vmem:[%s4 + $0xb0] sm:$0xff]
    %v897 = vld [vmem:[%s4 + $0xb8] sm:$0x1]
    %v898 = vperm.slane %v897, 0
    %v900 = vsel %vm235, %v895, 0
    %902 = vmatpush.msra.mxu0 0.0
    %903 = vmatpush.msra.mxu0 0.0
    %904 = vmatpush.msra.mxu0 0.0
    %905 = vmatpush.msra.mxu0 0.0
    %906 = vmatpush.msra.mxu0 0.0
    %907 = vmatpush.msra.mxu0 0.0
    %908 = vmatpush.msra.mxu0 0.0
    %909 = vmatpush.msra.mxu0 0.0
    %910 = vmatpush.msra.mxu0 0.0
    %911 = vmatpush.msra.mxu0 0.0
    %912 = vmatpush.msra.mxu0 0.0
    %913 = vmatpush.msra.mxu0 0.0
    %914 = vmatpush.msra.mxu0 0.0
    %915 = vmatpush.msra.mxu0 0.0
    %916 = vmatpush.msra.mxu0 0.0
    %917 = vmatpush.msra.mxu0 %v896
    %918 = vmatmul.f32.gmra.mxu0 %v900
    %v919 = vpop.f32.mrf.mxu0
    %v920 = vadd.f32 %v898, %v919
    %921 = vdwg.mxu0
    %v922 = vmax.f32 %v920, 0.0
    %v923 = vld [vmem:[%s4 + $0x80] sm:$0x3f]
    %v925 = vsel %vm840, %v922, 0
    %v928 = vsel %vm844, %v923, 0
    %930 = vmatpush.msra.mxu0 0.0
    %931 = vmatpush.msra.mxu0 0.0
    %932 = vmatpush.msra.mxu0 0.0
    %933 = vmatpush.msra.mxu0 0.0
    %934 = vmatpush.msra.mxu0 0.0
    %935 = vmatpush.msra.mxu0 0.0
    %936 = vmatpush.msra.mxu0 0.0
    %937 = vmatpush.msra.mxu0 0.0
    %938 = vmatpush.msra.mxu0 0.0
    %939 = vmatpush.msra.mxu0 0.0
    %940 = vmatpush.msra.mxu0 0.0
    %941 = vmatpush.msra.mxu0 0.0
    %942 = vmatpush.msra.mxu0 0.0
    %943 = vmatpush.msra.mxu0 0.0
    %944 = vmatpush.msra.mxu0 0.0
    %945 = vmatpush.msra.mxu0 %v928
    %946 = vmatmul.f32.gmra.mxu0 %v925
    %v947 = vpop.f32.mrf.mxu0
    %v948 = vadd.f32 0.0, %v947
    %949 = vdwg.mxu0
    %v950 = vadd.f32 %v835, %v948
    %v951 = vld [vmem:[%s4 + $0x88] sm:$0x1]
    %v952 = vperm.slane %v951, 0
    %v953 = vadd.f32 %v950, %v952
    %v954 = vmax.f32 %v953, 0.0
    %v955 = vld [vmem:[%s4 + $0xc0] sm:$0xff]
    %v956 = vld [vmem:[%s4 + $0xc8] sm:$0xff]
    %v957 = vld [vmem:[%s4 + $0xd0] sm:$0xff]
    %v958 = vld [vmem:[%s4 + $0xd8] sm:$0xff]
    %v959 = vld [vmem:[%s4 + $0xe0] sm:$0xff]
    %v960 = vld [vmem:[%s4 + $0xe8] sm:$0xff]
    %v961 = vld [vmem:[%s4 + $0xf0] sm:$0xff]
    %v962 = vld [vmem:[%s4 + $0xf8] sm:$0xff]
    %v963 = vld [vmem:[%s4 + $0x100] sm:$0xff]
    %v964 = vld [vmem:[%s4 + $0x108] sm:$0xff]
    %v965 = vld [vmem:[%s4 + $0x110] sm:$0xff]
    %v966 = vld [vmem:[%s4 + $0x118] sm:$0xff]
    %v967 = vld [vmem:[%s4 + $0x120] sm:$0xff]
    %v968 = vld [vmem:[%s4 + $0x128] sm:$0xff]
    %v969 = vld [vmem:[%s4 + $0x130] sm:$0xff]
    %v970 = vld [vmem:[%s4 + $0x138] sm:$0xff]
    %v971 = vld [vmem:[%s4 + $0x140] sm:$0x1]
    %v972 = vperm.slane %v971, 0
    %973 = vmatpush.msra.mxu0 %v970
    %974 = vmatpush.msra.mxu0 %v969
    %975 = vmatpush.msra.mxu0 %v968
    %976 = vmatpush.msra.mxu0 %v967
    %977 = vmatpush.msra.mxu0 %v966
    %978 = vmatpush.msra.mxu0 %v965
    %979 = vmatpush.msra.mxu0 %v964
    %980 = vmatpush.msra.mxu0 %v963
    %981 = vmatpush.msra.mxu0 %v962
    %982 = vmatpush.msra.mxu0 %v961
    %983 = vmatpush.msra.mxu0 %v960
    %984 = vmatpush.msra.mxu0 %v959
    %985 = vmatpush.msra.mxu0 %v958
    %986 = vmatpush.msra.mxu0 %v957
    %987 = vmatpush.msra.mxu0 %v956
    %988 = vmatpush.msra.mxu0 %v955
    %989 = vmatmul.f32.gmra.mxu0 %v954
    %v990 = vpop.f32.mrf.mxu0
    %v991 = vadd.f32 %v972, %v990
    %992 = vdwg.mxu0
    %v993 = vmax.f32 %v991, 0.0
    %v994 = vld [vmem:[%s4 + $0x148] sm:$0xff]
    %v995 = vld [vmem:[%s4 + $0x150] sm:$0xff]
    %v996 = vld [vmem:[%s4 + $0x158] sm:$0xff]
    %v997 = vld [vmem:[%s4 + $0x160] sm:$0xff]
    %v998 = vld [vmem:[%s4 + $0x168] sm:$0xff]
    %v999 = vld [vmem:[%s4 + $0x170] sm:$0xff]
    %v1000 = vld [vmem:[%s4 + $0x178] sm:$0xff]
    %v1001 = vld [vmem:[%s4 + $0x180] sm:$0xff]
    %v1002 = vld [vmem:[%s4 + $0x188] sm:$0xff]
    %v1003 = vld [vmem:[%s4 + $0x190] sm:$0xff]
    %v1004 = vld [vmem:[%s4 + $0x198] sm:$0xff]
    %v1005 = vld [vmem:[%s4 + $0x1a0] sm:$0xff]
    %v1006 = vld [vmem:[%s4 + $0x1a8] sm:$0xff]
    %v1007 = vld [vmem:[%s4 + $0x1b0] sm:$0xff]
    %v1008 = vld [vmem:[%s4 + $0x1b8] sm:$0xff]
    %v1009 = vld [vmem:[%s4 + $0x1c0] sm:$0xff]
    %v1010 = vld [vmem:[%s4 + $0x1c8] sm:$0x1]
    %v1011 = vperm.slane %v1010, 0
    %1012 = vmatpush.msra.mxu0 %v1009
    %1013 = vmatpush.msra.mxu0 %v1008
    %1014 = vmatpush.msra.mxu0 %v1007
    %1015 = vmatpush.msra.mxu0 %v1006
    %1016 = vmatpush.msra.mxu0 %v1005
    %1017 = vmatpush.msra.mxu0 %v1004
    %1018 = vmatpush.msra.mxu0 %v1003
    %1019 = vmatpush.msra.mxu0 %v1002
    %1020 = vmatpush.msra.mxu0 %v1001
    %1021 = vmatpush.msra.mxu0 %v1000
    %1022 = vmatpush.msra.mxu0 %v999
    %1023 = vmatpush.msra.mxu0 %v998
    %1024 = vmatpush.msra.mxu0 %v997
    %1025 = vmatpush.msra.mxu0 %v996
    %1026 = vmatpush.msra.mxu0 %v995
    %1027 = vmatpush.msra.mxu0 %v994
    %1028 = vmatmul.f32.gmra.mxu0 %v993
    %v1029 = vpop.f32.mrf.mxu0
    %v1030 = vadd.f32 %v1011, %v1029
    %1031 = vdwg.mxu0
    %vm1032 = vcmask 33792
    %1033 = vst.msk [vmem:[#allocation2] sm:$0x3] %vm1032, %v1030
    // Predicated region
    $region22: #{forward.1} parent=1 // pred_check
      _
    $region23: #{forward.1} parent=1 // pred_check_branch
      %1035 = sbr.rel (0) target = $region25
    $region24: #{forward.1} parent=1 // pred_region
      %1037 = vsyncadd [#allocation3], 0
      %s1039 = sshll.u32 [#allocation2], 4
      %s1040 = int_to_ptr.vmem [resolvable:$true] %s1039
      %s1041 = sshll.u32 %s5, 4
      %s1042 = int_to_ptr.hbm [resolvable:$true] %s1041
      %1044 = dma.vmem_to_hbm [thread:$0]  %s1040, 32, %s1042, [#allocation3]
    $region25: #{forward.1} parent=1 // pred_fallthru
      _
    // Predicated region
    $region26: #{forward.1} parent=1 // pred_check
      _
    $region27: #{forward.1} parent=1 // pred_check_branch
      %1046 = sbr.rel (0) target = $region29
    $region28: #{forward.1} parent=1 // pred_region
      %1048 = dma.done [#allocation3], 32
    $region29: #{forward.1} parent=1 // pred_fallthru
      _
    %1049 = vsyncpa [#allocation3], 1

</llo_original>
